<compile_context>
chip_gen: v7x
topology: tpu7x:2x2x1
jax: 0.10.0
libtpu: 0.0.40
codegen_flags: <defaults>
</compile_context>

<pallas_src>
import functools
import math

import jax
import jax.numpy as jnp
from jax.experimental import pallas as pl
from jax.experimental.pallas import tpu as pltpu


def _round_up(x, m):
    return ((x + m - 1) // m) * m


def _nlpl_kernel(data_ref, h_ref, diag_ref, j_ref, out_ref, *,
                 beta, sub, T, tT, tpc, N, Np,
                 need_row_mask, need_lane_mask, mm_dtype, logsig_bf16):
    t = pl.program_id(2)

    @pl.when(t == 0)
    def _():
        out_ref[...] = jnp.zeros_like(out_ref)

    s_i8 = data_ref[0]                              # (tT, Np) int8 spins (+/-1; 0 in padding)
    s32 = s_i8.astype(jnp.float32)
    s_mm = s32 if mm_dtype == jnp.float32 else s32.astype(mm_dtype)
    J = j_ref[0]                                    # (Np, Np) mm_dtype
    h = h_ref[0]                                    # (1, Np)  f32
    dJ = diag_ref[0]                                # (1, Np)  f32

    # state @ J on the MXU, f32 accumulation.
    sj = jnp.dot(s_mm, J, preferred_element_type=jnp.float32)     # (tT, Np) f32

    # Exact identity (no +/-1 assumption): s @ J_no_diag == s @ J - s * diag(J)
    delta = (2.0 * beta) * s32 * (h + sj - s32 * dJ)              # (tT, Np) f32

    # Numerically stable log-sigmoid: min(x, 0) - log1p(exp(-|x|)).
    if logsig_bf16:
        # EUP transcendentals in bf16 (v6e/v7x); the linear part stays f32.
        a16 = jnp.abs(delta).astype(jnp.bfloat16)
        soft = jnp.log1p(jnp.exp(-a16)).astype(jnp.float32)
    else:
        soft = jnp.log1p(jnp.exp(-jnp.abs(delta)))
    log_sig = jnp.minimum(delta, 0.0) - soft

    if need_lane_mask or need_row_mask:
        valid = None
        if need_lane_mask:                          # zero-padded node lanes
            lane = jax.lax.broadcasted_iota(jnp.int32, (tT, Np), 1)
            valid = lane < N
        if need_row_mask:                           # tail / duplicated (core-split) time tiles
            tile = pl.program_id(1) * tpc + t
            row = jax.lax.broadcasted_iota(jnp.int32, (tT, Np), 0)
            rvalid = (tile * tT + row) < T
            valid = rvalid if valid is None else jnp.logical_and(valid, rvalid)
        log_sig = jnp.where(valid, log_sig, 0.0)

    # Partial reduction using only VPU adds: (tT, Np) -> (sub, Np).
    out_ref[0, 0] += jnp.sum(log_sig.reshape(tT // sub, sub, Np), axis=0)


def _vmem_budget_bytes():
    cap = None
    try:
        cap = getattr(pltpu.get_tpu_info(), "vmem_capacity_bytes", None)
    except Exception:
        cap = None
    if not cap:
        cap = 128 << 20
    # ~75% of physical VMEM: ~96 MiB on v5e/v6e (128 MiB), ~48 MiB on v7x (64 MiB).
    return int(min(cap * 3 // 4, 100 << 20))


def _choose_t_tile(T, Np, j_block_bytes, vmem_limit):
    """Largest useful time tile that fits the VMEM budget (preferring x256)."""
    fixed = j_block_bytes + 8 * Np * 4 + (256 << 10)       # J + h/diag/out blocks + slack
    avail = max(vmem_limit - fixed, 1 << 20)
    per_row = Np * (2 * 1 + 6 * 4)     # 2 int8 data buffers + ~6 live f32 temporaries
    tmax = avail // per_row
    tT = int(min(T, 1024, max(tmax, 32)))
    if tT >= 256:
        tT = (tT // 256) * 256         # fill the 256-wide MXU M dim (v6e/v7x)
    elif tT >= 32:
        tT = (tT // 32) * 32           # int8 sublane-packing granularity
    else:
        tT = T                         # tiny T: one full-extent block
    return tT


def prepare_spin_data(data_ts):
    """One-time prep of the (M, T, N) +/-1 spin series: int8 + node padding.

    Compute this once and reuse across loss evaluations so the dominant HBM
    stream is never re-cast / re-padded per step.
    """
    M, T, N = data_ts.shape
    Np = _round_up(N, 128)
    d = data_ts.astype(jnp.int8)
    if Np != N:
        d = jnp.pad(d, ((0, 0), (0, 0), (0, Np - N)))
    return d


def ising_nlpl(data_ts, h, J, *, beta, use_bf16_matmul=True,
               fast_logsigmoid=False, t_core_splits=1):
    """Negative log pseudo-likelihood.

    data_ts: (M, T, N) +/-1 spins, or the output of prepare_spin_data (int8,
             node-padded).  h: (M, 1, N), J: (M, N, N).  Returns a f32 scalar.
    t_core_splits: split the time reduction across this many TensorCores
             (useful on v7x when M is too small to occupy both cores).
    """
    M, one, N = h.shape
    assert one == 1 and J.shape == (M, N, N)
    Np = _round_up(N, 128)

    if data_ts.dtype != jnp.int8 or data_ts.shape[-1] != Np:
        # One-shot fallback; training loops should prepare once and persist.
        data_ts = prepare_spin_data(data_ts)
    assert data_ts.shape[0] == M and data_ts.shape[-1] == Np
    T = data_ts.shape[1]

    mm_dtype = jnp.bfloat16 if use_bf16_matmul else jnp.float32
    pad = Np - N
    J_c = jnp.pad(J, ((0, 0), (0, pad), (0, pad))).astype(mm_dtype)      # (M, Np, Np)
    h_f = jnp.pad(h, ((0, 0), (0, 0), (0, pad))).astype(jnp.float32)     # (M, 1, Np)
    # diag taken from the exact matmul operand so the correction cancels the
    # matmul's diagonal contribution.
    diag_J = jnp.einsum("mii->mi", J_c).astype(jnp.float32)[:, None, :]  # (M, 1, Np)

    vmem_limit = _vmem_budget_bytes()
    j_bytes = Np * Np * jnp.dtype(mm_dtype).itemsize
    # TODO(synk): for very large N (J block comparable to the VMEM budget) add a
    # column tile over J as an extra grid axis; not needed at these shapes.
    tT = _choose_t_tile(T, Np, j_bytes, vmem_limit)
    sub = math.gcd(tT, 8)
    t_tiles = -(-T // tT)

    C = max(1, int(t_core_splits))
    tpc = -(-t_tiles // C)                     # time tiles handled per core-split
    need_clamp = (C * tpc != t_tiles)
    need_row_mask = need_clamp or (T % tT != 0)
    need_lane_mask = (Np != N)

    if need_clamp:
        data_map = lambda m, c, t: (m, jnp.minimum(c * tpc + t, t_tiles - 1), 0)
    else:
        data_map = lambda m, c, t: (m, c * tpc + t, 0)

    kernel = functools.partial(
        _nlpl_kernel, beta=float(beta), sub=sub, T=T, tT=tT, tpc=tpc,
        N=N, Np=Np, need_row_mask=need_row_mask, need_lane_mask=need_lane_mask,
        mm_dtype=mm_dtype, logsig_bf16=bool(fast_logsigmoid))

    def build(j_pipeline_mode):
        if j_pipeline_mode is None:
            j_spec = pl.BlockSpec((1, Np, Np), lambda m, c, t: (m, 0, 0))
        else:
            # J is t-invariant: a single pipeline buffer saves Np^2 bytes of VMEM.
            j_spec = pl.BlockSpec((1, Np, Np), lambda m, c, t: (m, 0, 0),
                                  pipeline_mode=j_pipeline_mode)
        return pl.pallas_call(
            kernel,
            out_shape=jax.ShapeDtypeStruct((C, M, sub, Np), jnp.float32),
            grid_spec=pltpu.PrefetchScalarGridSpec(
                num_scalar_prefetch=0,
                grid=(M, C, tpc),
                in_specs=[
                    # data_ts[m]; when HBM-bound, pipeline_mode=pl.Buffered(3)
                    # here is a cheap knob to sweep.
                    pl.BlockSpec((1, tT, Np), data_map),
                    pl.BlockSpec((1, 1, Np), lambda m, c, t: (m, 0, 0)),   # h[m]
                    pl.BlockSpec((1, 1, Np), lambda m, c, t: (m, 0, 0)),   # diag(J[m])
                    j_spec,                                                # J[m]
                ],
                out_specs=pl.BlockSpec((1, 1, sub, Np),
                                       lambda m, c, t: (c, m, 0, 0)),
            ),
            compiler_params=pltpu.CompilerParams(
                dimension_semantics=("parallel", "parallel", "arbitrary"),
                vmem_limit_bytes=vmem_limit,
            ),
        )

    try:
        partial_sums = build(pl.Buffered(1))(data_ts, h_f, diag_J, J_c)
    except Exception:
        # Fallback for jax versions without single-buffer pipeline_mode support:
        # default double-buffering of the (t-invariant) J block.
        partial_sums = build(None)(data_ts, h_f, diag_J, J_c)

    total = jnp.sum(partial_sums)
    return -(total / float(M * T * N))


def ising_nlpl_ref(data_ts, h, J, *, beta):
    """Pure-JAX reference mirroring the PyTorch forward."""
    diag = jnp.einsum("mii->mi", J)
    J_no_diag = J - jax.vmap(jnp.diag)(diag)
    delta_h = beta * 2.0 * data_ts * (h + jnp.matmul(data_ts, J_no_diag))
    return -jnp.mean(jax.nn.log_sigmoid(delta_h))


if __name__ == "__main__":
    # Small deterministic setup: num_models=2, num_time_steps=16, num_nodes=32.
    M, T, N = 2, 16, 32
    beta = 0.5

    key = jax.random.PRNGKey(0)
    k_h, k_j, k_x = jax.random.split(key, 3)

    h = jax.random.normal(k_h, (M, 1, N), dtype=jnp.float32)
    J = jax.random.normal(k_j, (M, N, N), dtype=jnp.float32)

    # Ising spin time series: exactly +/-1.
    spins = jnp.sign(jax.random.normal(k_x, (M, T, N), dtype=jnp.float32))
    spins = jnp.where(spins == 0.0, 1.0, spins)

    loss_ref = ising_nlpl_ref(spins, h, J, beta=beta)

    # One-time int8 + node-padding prep (persisted across calls by the caller).
    data_prep = prepare_spin_data(spins)

    # Full-precision MXU path: must match the reference tightly.
    loss_f32 = jax.block_until_ready(
        ising_nlpl(data_prep, h, J, beta=beta, use_bf16_matmul=False))
    assert jnp.allclose(loss_f32, loss_ref, rtol=1e-5, atol=1e-5), (loss_f32, loss_ref)

    # Fast bf16-MXU path (int8 data stream; J rounds at ~1e-3 relative).
    loss_bf16 = jax.block_until_ready(
        ising_nlpl(data_prep, h, J, beta=beta))
    assert jnp.allclose(loss_bf16, loss_ref, rtol=2e-2, atol=2e-2), (loss_bf16, loss_ref)

    # bf16 transcendentals + time-reduction split across 2 TensorCores
    # (correct on single-core chips too; the spare slot is fully masked).
    loss_split = jax.block_until_ready(
        ising_nlpl(data_prep, h, J, beta=beta,
                   fast_logsigmoid=True, t_core_splits=2))
    assert jnp.allclose(loss_split, loss_ref, rtol=2e-2, atol=2e-2), (loss_split, loss_ref)

    print("KERNEL_OK")
</pallas_src>

<mosaic_0001>
module attributes {stable_mosaic.version = 11 : i64} {
  func.func @_nlpl_kernel(%arg0: i32, %arg1: i32, %arg2: i32, %arg3: memref<1x16x128xi8, #tpu.memory_space<vmem>>, %arg4: memref<1x1x128xf32, #tpu.memory_space<vmem>>, %arg5: memref<1x1x128xf32, #tpu.memory_space<vmem>>, %arg6: memref<1x128x128xf32, #tpu.memory_space<vmem>>, %arg7: memref<1x1x8x128xf32, #tpu.memory_space<vmem>>) attributes {dimension_semantics = [#tpu.dimension_semantics<parallel>, #tpu.dimension_semantics<parallel>, #tpu.dimension_semantics<arbitrary>], iteration_bounds = array<i64: 2, 1, 1>, scalar_prefetch = 0 : i64, scratch_operands = 0 : i64, tpu.core_type = #tpu.core_type<tc>, window_params = [{transform_indices = @transform_0, window_bounds = array<i64: 1, 16, 128>}, {transform_indices = @transform_1, window_bounds = array<i64: 1, 1, 128>}, {transform_indices = @transform_2, window_bounds = array<i64: 1, 1, 128>}, {pipeline_mode = #tpu.pipeline_mode<synchronous>, transform_indices = @transform_3, window_bounds = array<i64: 1, 128, 128>}, {transform_indices = @transform_4, window_bounds = array<i64: 1, 1, 8, 128>}]} {
    %c0_i32 = arith.constant 0 : i32
    %0 = arith.cmpi eq, %arg2, %c0_i32 : i32
    %1 = arith.extui %0 : i1 to i32
    %c0_i32_0 = arith.constant 0 : i32
    %2 = arith.cmpi ne, %1, %c0_i32_0 : i32
    scf.if %2 {
      %cst_25 = arith.constant 0.000000e+00 : f32
      %42 = vector.broadcast %cst_25 : f32 to vector<1x1x8x128xf32>
      %c0_26 = arith.constant 0 : index
      %c0_27 = arith.constant 0 : index
      %c0_28 = arith.constant 0 : index
      %c0_29 = arith.constant 0 : index
      %43 = vector.load %arg7[%c0_26, %c0_27, %c0_28, %c0_29] : memref<1x1x8x128xf32, #tpu.memory_space<vmem>>, vector<1x1x8x128xf32>
      tpu.vector_store %arg7[%c0_26, %c0_27, %c0_28, %c0_29], %42 {strides = array<i32>} : memref<1x1x8x128xf32, #tpu.memory_space<vmem>>, vector<1x1x8x128xf32>,
    } else {
    }
    %c0 = arith.constant 0 : index
    %c0_1 = arith.constant 0 : index
    %c0_2 = arith.constant 0 : index
    %3 = vector.load %arg3[%c0, %c0_1, %c0_2] : memref<1x16x128xi8, #tpu.memory_space<vmem>>, vector<1x16x128xi8>
    %4 = vector.shape_cast %3 : vector<1x16x128xi8> to vector<16x128xi8>
    %5 = arith.sitofp %4 : vector<16x128xi8> to vector<16x128xf32>
    %c0_3 = arith.constant 0 : index
    %c0_4 = arith.constant 0 : index
    %c0_5 = arith.constant 0 : index
    %6 = vector.load %arg6[%c0_3, %c0_4, %c0_5] : memref<1x128x128xf32, #tpu.memory_space<vmem>>, vector<1x128x128xf32>
    %7 = vector.shape_cast %6 : vector<1x128x128xf32> to vector<128x128xf32>
    %c0_6 = arith.constant 0 : index
    %c0_7 = arith.constant 0 : index
    %c0_8 = arith.constant 0 : index
    %8 = vector.load %arg4[%c0_6, %c0_7, %c0_8] : memref<1x1x128xf32, #tpu.memory_space<vmem>>, vector<1x1x128xf32>
    %9 = vector.shape_cast %8 : vector<1x1x128xf32> to vector<1x128xf32>
    %c0_9 = arith.constant 0 : index
    %c0_10 = arith.constant 0 : index
    %c0_11 = arith.constant 0 : index
    %10 = vector.load %arg5[%c0_9, %c0_10, %c0_11] : memref<1x1x128xf32, #tpu.memory_space<vmem>>, vector<1x1x128xf32>
    %11 = vector.shape_cast %10 : vector<1x1x128xf32> to vector<1x128xf32>
    %cst = arith.constant dense<0.000000e+00> : vector<16x128xf32>
    %12 = tpu.matmul %5, %7, %cst {dimension_numbers = #tpu.dot_dimension_numbers<[1], [0], [0], [1], [0, 0, 1, 1], [], []>} : vector<16x128xf32>, vector<128x128xf32>, vector<16x128xf32> -> vector<16x128xf32>
    %cst_12 = arith.constant 1.000000e+00 : f32
    %13 = vector.broadcast %cst_12 : f32 to vector<16x128xf32>
    %14 = arith.mulf %13, %5 : vector<16x128xf32>
    %15 = vector.broadcast %9 : vector<1x128xf32> to vector<16x128xf32>
    %16 = arith.addf %15, %12 : vector<16x128xf32>
    %17 = vector.broadcast %11 : vector<1x128xf32> to vector<16x128xf32>
    %18 = arith.mulf %5, %17 : vector<16x128xf32>
    %19 = arith.subf %16, %18 : vector<16x128xf32>
    %20 = arith.mulf %14, %19 : vector<16x128xf32>
    %21 = math.absf %20 : vector<16x128xf32>
    %cst_13 = arith.constant 0.000000e+00 : f32
    %22 = vector.broadcast %cst_13 : f32 to vector<16x128xf32>
    %23 = arith.subf %22, %21 : vector<16x128xf32>
    %24 = math.exp %23 : vector<16x128xf32>
    %25 = math.log1p %24 : vector<16x128xf32>
    %cst_14 = arith.constant 0.000000e+00 : f32
    %26 = vector.broadcast %cst_14 : f32 to vector<16x128xf32>
    %27 = arith.minimumf %20, %26 : vector<16x128xf32>
    %28 = arith.subf %27, %25 : vector<16x128xf32>
    %29 = tpu.iota {dimensions = array<i32: 1>} : vector<16x128xi32>
    %c32_i32 = arith.constant 32 : i32
    %30 = vector.broadcast %c32_i32 : i32 to vector<16x128xi32>
    %31 = arith.cmpi slt, %29, %30 : vector<16x128xi32>
    %cst_15 = arith.constant 0.000000e+00 : f32
    %32 = vector.broadcast %cst_15 : f32 to vector<16x128xf32>
    %33 = arith.select %31, %28, %32 : vector<16x128xi1>, vector<16x128xf32>
    %c0_16 = arith.constant 0 : index
    %c0_17 = arith.constant 0 : index
    %c0_18 = arith.constant 0 : index
    %c0_19 = arith.constant 0 : index
    %34 = vector.load %arg7[%c0_16, %c0_17, %c0_18, %c0_19] : memref<1x1x8x128xf32, #tpu.memory_space<vmem>>, vector<1x1x8x128xf32>
    %35 = vector.shape_cast %34 : vector<1x1x8x128xf32> to vector<8x128xf32>
    %36 = vector.shape_cast %33 : vector<16x128xf32> to vector<2x8x128xf32>
    %cst_20 = arith.constant dense<0.000000e+00> : vector<8x128xf32>
    %37 = vector.multi_reduction <add>, %36, %cst_20 [0] : vector<2x8x128xf32> to vector<8x128xf32>
    %38 = arith.addf %35, %37 : vector<8x128xf32>
    %c0_21 = arith.constant 0 : index
    %c0_22 = arith.constant 0 : index
    %c0_23 = arith.constant 0 : index
    %c0_24 = arith.constant 0 : index
    %39 = vector.load %arg7[%c0_21, %c0_22, %c0_23, %c0_24] : memref<1x1x8x128xf32, #tpu.memory_space<vmem>>, vector<1x1x8x128xf32>
    %40 = vector.shape_cast %39 : vector<1x1x8x128xf32> to vector<8x128xf32>
    %41 = vector.shape_cast %38 : vector<8x128xf32> to vector<1x1x8x128xf32>
    tpu.vector_store %arg7[%c0_21, %c0_22, %c0_23, %c0_24], %41 {strides = array<i32>} : memref<1x1x8x128xf32, #tpu.memory_space<vmem>>, vector<1x1x8x128xf32>,
    return
  }
  func.func @transform_0(%arg0: i32, %arg1: i32, %arg2: i32) -> (i32, i32, i32) {
    %c1_i32 = arith.constant 1 : i32
    %0 = arith.muli %arg1, %c1_i32 : i32
    %1 = arith.addi %0, %arg2 : i32
    %c0_i32 = arith.constant 0 : i32
    %c0_i32_0 = arith.constant 0 : i32
    return %arg0, %1, %c0_i32 : i32, i32, i32
  }
  func.func @transform_1(%arg0: i32, %arg1: i32, %arg2: i32) -> (i32, i32, i32) {
    %c0_i32 = arith.constant 0 : i32
    %c0_i32_0 = arith.constant 0 : i32
    %c0_i32_1 = arith.constant 0 : i32
    return %arg0, %c0_i32, %c0_i32_0 : i32, i32, i32
  }
  func.func @transform_2(%arg0: i32, %arg1: i32, %arg2: i32) -> (i32, i32, i32) {
    %c0_i32 = arith.constant 0 : i32
    %c0_i32_0 = arith.constant 0 : i32
    %c0_i32_1 = arith.constant 0 : i32
    return %arg0, %c0_i32, %c0_i32_0 : i32, i32, i32
  }
  func.func @transform_3(%arg0: i32, %arg1: i32, %arg2: i32) -> (i32, i32, i32) {
    %c0_i32 = arith.constant 0 : i32
    %c0_i32_0 = arith.constant 0 : i32
    %c0_i32_1 = arith.constant 0 : i32
    return %arg0, %c0_i32, %c0_i32_0 : i32, i32, i32
  }
  func.func @transform_4(%arg0: i32, %arg1: i32, %arg2: i32) -> (i32, i32, i32, i32) {
    %c0_i32 = arith.constant 0 : i32
    %c0_i32_0 = arith.constant 0 : i32
    %c0_i32_1 = arith.constant 0 : i32
    return %arg1, %arg0, %c0_i32, %c0_i32_0 : i32, i32, i32, i32
  }
}

module attributes {stable_mosaic.version = 11 : i64} {
  func.func @_nlpl_kernel(%arg0: i32, %arg1: i32, %arg2: i32, %arg3: memref<1x16x128xi8, #tpu.memory_space<vmem>>, %arg4: memref<1x1x128xf32, #tpu.memory_space<vmem>>, %arg5: memref<1x1x128xf32, #tpu.memory_space<vmem>>, %arg6: memref<1x128x128xf32, #tpu.memory_space<vmem>>, %arg7: memref<1x1x8x128xf32, #tpu.memory_space<vmem>>) attributes {dimension_semantics = [#tpu.dimension_semantics<parallel>, #tpu.dimension_semantics<parallel>, #tpu.dimension_semantics<arbitrary>], iteration_bounds = array<i64: 2, 1, 1>, scalar_prefetch = 0 : i64, scratch_operands = 0 : i64, tpu.core_type = #tpu.core_type<tc>, window_params = [{transform_indices = @transform_0, window_bounds = array<i64: 1, 16, 128>}, {transform_indices = @transform_1, window_bounds = array<i64: 1, 1, 128>}, {transform_indices = @transform_2, window_bounds = array<i64: 1, 1, 128>}, {transform_indices = @transform_3, window_bounds = array<i64: 1, 128, 128>}, {transform_indices = @transform_4, window_bounds = array<i64: 1, 1, 8, 128>}]} {
    %c0_i32 = arith.constant 0 : i32
    %0 = arith.cmpi eq, %arg2, %c0_i32 : i32
    %1 = arith.extui %0 : i1 to i32
    %c0_i32_0 = arith.constant 0 : i32
    %2 = arith.cmpi ne, %1, %c0_i32_0 : i32
    scf.if %2 {
      %cst_25 = arith.constant 0.000000e+00 : f32
      %42 = vector.broadcast %cst_25 : f32 to vector<1x1x8x128xf32>
      %c0_26 = arith.constant 0 : index
      %c0_27 = arith.constant 0 : index
      %c0_28 = arith.constant 0 : index
      %c0_29 = arith.constant 0 : index
      %43 = vector.load %arg7[%c0_26, %c0_27, %c0_28, %c0_29] : memref<1x1x8x128xf32, #tpu.memory_space<vmem>>, vector<1x1x8x128xf32>
      tpu.vector_store %arg7[%c0_26, %c0_27, %c0_28, %c0_29], %42 {strides = array<i32>} : memref<1x1x8x128xf32, #tpu.memory_space<vmem>>, vector<1x1x8x128xf32>,
    } else {
    }
    %c0 = arith.constant 0 : index
    %c0_1 = arith.constant 0 : index
    %c0_2 = arith.constant 0 : index
    %3 = vector.load %arg3[%c0, %c0_1, %c0_2] : memref<1x16x128xi8, #tpu.memory_space<vmem>>, vector<1x16x128xi8>
    %4 = vector.shape_cast %3 : vector<1x16x128xi8> to vector<16x128xi8>
    %5 = arith.sitofp %4 : vector<16x128xi8> to vector<16x128xf32>
    %c0_3 = arith.constant 0 : index
    %c0_4 = arith.constant 0 : index
    %c0_5 = arith.constant 0 : index
    %6 = vector.load %arg6[%c0_3, %c0_4, %c0_5] : memref<1x128x128xf32, #tpu.memory_space<vmem>>, vector<1x128x128xf32>
    %7 = vector.shape_cast %6 : vector<1x128x128xf32> to vector<128x128xf32>
    %c0_6 = arith.constant 0 : index
    %c0_7 = arith.constant 0 : index
    %c0_8 = arith.constant 0 : index
    %8 = vector.load %arg4[%c0_6, %c0_7, %c0_8] : memref<1x1x128xf32, #tpu.memory_space<vmem>>, vector<1x1x128xf32>
    %9 = vector.shape_cast %8 : vector<1x1x128xf32> to vector<1x128xf32>
    %c0_9 = arith.constant 0 : index
    %c0_10 = arith.constant 0 : index
    %c0_11 = arith.constant 0 : index
    %10 = vector.load %arg5[%c0_9, %c0_10, %c0_11] : memref<1x1x128xf32, #tpu.memory_space<vmem>>, vector<1x1x128xf32>
    %11 = vector.shape_cast %10 : vector<1x1x128xf32> to vector<1x128xf32>
    %cst = arith.constant dense<0.000000e+00> : vector<16x128xf32>
    %12 = tpu.matmul %5, %7, %cst {dimension_numbers = #tpu.dot_dimension_numbers<[1], [0], [0], [1], [0, 0, 1, 1], [], []>} : vector<16x128xf32>, vector<128x128xf32>, vector<16x128xf32> -> vector<16x128xf32>
    %cst_12 = arith.constant 1.000000e+00 : f32
    %13 = vector.broadcast %cst_12 : f32 to vector<16x128xf32>
    %14 = arith.mulf %13, %5 : vector<16x128xf32>
    %15 = vector.broadcast %9 : vector<1x128xf32> to vector<16x128xf32>
    %16 = arith.addf %15, %12 : vector<16x128xf32>
    %17 = vector.broadcast %11 : vector<1x128xf32> to vector<16x128xf32>
    %18 = arith.mulf %5, %17 : vector<16x128xf32>
    %19 = arith.subf %16, %18 : vector<16x128xf32>
    %20 = arith.mulf %14, %19 : vector<16x128xf32>
    %21 = math.absf %20 : vector<16x128xf32>
    %cst_13 = arith.constant 0.000000e+00 : f32
    %22 = vector.broadcast %cst_13 : f32 to vector<16x128xf32>
    %23 = arith.subf %22, %21 : vector<16x128xf32>
    %24 = math.exp %23 : vector<16x128xf32>
    %25 = math.log1p %24 : vector<16x128xf32>
    %cst_14 = arith.constant 0.000000e+00 : f32
    %26 = vector.broadcast %cst_14 : f32 to vector<16x128xf32>
    %27 = arith.minimumf %20, %26 : vector<16x128xf32>
    %28 = arith.subf %27, %25 : vector<16x128xf32>
    %29 = tpu.iota {dimensions = array<i32: 1>} : vector<16x128xi32>
    %c32_i32 = arith.constant 32 : i32
    %30 = vector.broadcast %c32_i32 : i32 to vector<16x128xi32>
    %31 = arith.cmpi slt, %29, %30 : vector<16x128xi32>
    %cst_15 = arith.constant 0.000000e+00 : f32
    %32 = vector.broadcast %cst_15 : f32 to vector<16x128xf32>
    %33 = arith.select %31, %28, %32 : vector<16x128xi1>, vector<16x128xf32>
    %c0_16 = arith.constant 0 : index
    %c0_17 = arith.constant 0 : index
    %c0_18 = arith.constant 0 : index
    %c0_19 = arith.constant 0 : index
    %34 = vector.load %arg7[%c0_16, %c0_17, %c0_18, %c0_19] : memref<1x1x8x128xf32, #tpu.memory_space<vmem>>, vector<1x1x8x128xf32>
    %35 = vector.shape_cast %34 : vector<1x1x8x128xf32> to vector<8x128xf32>
    %36 = vector.shape_cast %33 : vector<16x128xf32> to vector<2x8x128xf32>
    %cst_20 = arith.constant dense<0.000000e+00> : vector<8x128xf32>
    %37 = vector.multi_reduction <add>, %36, %cst_20 [0] : vector<2x8x128xf32> to vector<8x128xf32>
    %38 = arith.addf %35, %37 : vector<8x128xf32>
    %c0_21 = arith.constant 0 : index
    %c0_22 = arith.constant 0 : index
    %c0_23 = arith.constant 0 : index
    %c0_24 = arith.constant 0 : index
    %39 = vector.load %arg7[%c0_21, %c0_22, %c0_23, %c0_24] : memref<1x1x8x128xf32, #tpu.memory_space<vmem>>, vector<1x1x8x128xf32>
    %40 = vector.shape_cast %39 : vector<1x1x8x128xf32> to vector<8x128xf32>
    %41 = vector.shape_cast %38 : vector<8x128xf32> to vector<1x1x8x128xf32>
    tpu.vector_store %arg7[%c0_21, %c0_22, %c0_23, %c0_24], %41 {strides = array<i32>} : memref<1x1x8x128xf32, #tpu.memory_space<vmem>>, vector<1x1x8x128xf32>,
    return
  }
  func.func @transform_0(%arg0: i32, %arg1: i32, %arg2: i32) -> (i32, i32, i32) {
    %c1_i32 = arith.constant 1 : i32
    %0 = arith.muli %arg1, %c1_i32 : i32
    %1 = arith.addi %0, %arg2 : i32
    %c0_i32 = arith.constant 0 : i32
    %c0_i32_0 = arith.constant 0 : i32
    return %arg0, %1, %c0_i32 : i32, i32, i32
  }
  func.func @transform_1(%arg0: i32, %arg1: i32, %arg2: i32) -> (i32, i32, i32) {
    %c0_i32 = arith.constant 0 : i32
    %c0_i32_0 = arith.constant 0 : i32
    %c0_i32_1 = arith.constant 0 : i32
    return %arg0, %c0_i32, %c0_i32_0 : i32, i32, i32
  }
  func.func @transform_2(%arg0: i32, %arg1: i32, %arg2: i32) -> (i32, i32, i32) {
    %c0_i32 = arith.constant 0 : i32
    %c0_i32_0 = arith.constant 0 : i32
    %c0_i32_1 = arith.constant 0 : i32
    return %arg0, %c0_i32, %c0_i32_0 : i32, i32, i32
  }
  func.func @transform_3(%arg0: i32, %arg1: i32, %arg2: i32) -> (i32, i32, i32) {
    %c0_i32 = arith.constant 0 : i32
    %c0_i32_0 = arith.constant 0 : i32
    %c0_i32_1 = arith.constant 0 : i32
    return %arg0, %c0_i32, %c0_i32_0 : i32, i32, i32
  }
  func.func @transform_4(%arg0: i32, %arg1: i32, %arg2: i32) -> (i32, i32, i32, i32) {
    %c0_i32 = arith.constant 0 : i32
    %c0_i32_0 = arith.constant 0 : i32
    %c0_i32_1 = arith.constant 0 : i32
    return %arg1, %arg0, %c0_i32, %c0_i32_0 : i32, i32, i32, i32
  }
}

</mosaic_0001>

<llo_original>
// kernel: tpu_custom_call.1
$region0: #{tpu_custom_call.1}
  #allocation0 [shape = 'u32[]', space=smem, size = 0x4, offset = 0x4, fixed_abs, tag = 'smem constant byte address 0x4 - core index']
  #allocation1 [shape = 'u32[144,128]{1,0:T(1,128)}', space=vmem, size = 0x12000, scoped, tag = 'internal scratch']
  %s0 = inlined_call_operand.hbm [shape: s8[2,16,128], index: 0, kind: input, shape index: {}]
  %s1 = inlined_call_operand.hbm [shape: f32[2,1,128], index: 1, kind: input, shape index: {}]
  %s2 = inlined_call_operand.hbm [shape: f32[2,1,128], index: 2, kind: input, shape index: {}]
  %s3 = inlined_call_operand.hbm [shape: f32[2,128,128], index: 3, kind: input, shape index: {}]
  %s4 = inlined_call_operand.hbm [shape: f32[1,2,8,128], index: 4, kind: output, shape index: {}]
  %s5 = sld [smem:[#allocation0]]
  $region69: #{tpu_custom_call.1} parent=0
    _
  %s7 = ssub.s32 1, %s5
  %s8 = scalar_select 0, %s7, %s5
  $region1: #{tpu_custom_call.1} parent=0
    #allocation2 [shape = 'u8[4096]{0}', space=vmem, size = 0x1000, scoped, tag = 'input window, operand 0']
    #allocation3 [shape = 's32[2]{0}', space=sflag, size = 0x8, scoped, tag = 'scoped memory for tpu_custom_call.1']
    #allocation4 [shape = 's32[2]{0}', space=sflag, size = 0x8, scoped, tag = 'scoped memory for tpu_custom_call.1']
    #allocation5 [shape = 'u8[1024]{0}', space=vmem, size = 0x400, scoped, tag = 'input window, operand 1']
    #allocation6 [shape = 's32[2]{0}', space=sflag, size = 0x8, scoped, tag = 'scoped memory for tpu_custom_call.1']
    #allocation7 [shape = 'u8[1024]{0}', space=vmem, size = 0x400, scoped, tag = 'input window, operand 2']
    #allocation8 [shape = 'u8[65536]{0}', space=vmem, size = 0x10000, scoped, tag = 'input window, operand 3, single buffered']
    #allocation9 [shape = 's32[1]{0}', space=sflag, size = 0x4, scoped, tag = 'scoped memory for tpu_custom_call.1']
    #allocation10 [shape = 'u8[8192]{0}', space=vmem, size = 0x2000, scoped, tag = 'output window, operand 0']
    %9 = vsyncpa [#allocation3], 0
    %s10 = scalar_lea.sflag [#allocation3], 1
    %11 = vsyncpa %s10, 0
    %12 = vsyncpa [#allocation6], 0
    %s13 = scalar_lea.sflag [#allocation6], 1
    %14 = vsyncpa %s13, 0
    %15 = vsyncpa [#allocation9], 0
    %16 = vsyncpa [#allocation4], 0
    %s17 = scalar_lea.sflag [#allocation4], 1
    %18 = vsyncpa %s17, 0
    loop: start=0, step=1, limit=4
    $region2: #{tpu_custom_call.1} parent=1 // loop_pre_header
      _
    $region3: #{tpu_custom_call.1} parent=1 // loop_header
      %s20 = sphi 0, %s24
      %p21 = scmp.ge.s32.totalorder %s20, 4
      %s27 = sphi 0, %s46
      %s28 = sphi 0, %s42
      %s29 = sphi 0, %s38
      %s30 = sphi 0, %s27
      %s31 = sphi 0, %s28
      %s32 = sphi 0, %s29
      %s33 = sphi 0, %s30
      %s34 = sphi 0, %s31
      %s35 = sphi 0, %s32
      %s53 = sphi 0, %s55
      %s56 = sphi 0, %s53
      %s57 = sphi 0, %s56
      %s73 = sphi 0, %s57
      %s79 = sphi 0, %s81
      %s82 = sphi 0, %s79
      %s83 = sphi 0, %s82
      %s99 = sphi 0, %s83
      %s105 = sphi 0, %s107
      %s108 = sphi 0, %s105
      %s109 = sphi 0, %s108
      %s125 = sphi 0, %s109
      %s131 = sphi 0, %s133
      %s134 = sphi 0, %s131
      %s135 = sphi 0, %s134
      %s151 = sphi 0, %s135
      %s159 = sphi 0, %s161
      %s162 = sphi 0, %s159
      %s163 = sphi 0, %s162
      %s179 = sphi 0, %s163
    $region4: #{tpu_custom_call.1} parent=1 // loop_header_branch
      %23 = sbr.rel (%p21) target = $region8
    $region5: #{tpu_custom_call.1} parent=1 // loop_body
      %s25 = ssub.s32 %s20, 1
      %s26 = ssub.s32 %s20, 2
      %s36 = sadd.s32 1, %s29
      %p37 = scmp.ge.s32.totalorder %s36, 1
      %s38 = scalar_select %p37, 0, %s36
      %s39 = sadd.s32 1, %s28
      %s40 = scalar_select %p37, %s39, %s28
      %p41 = scmp.ge.s32.totalorder %s40, 1
      %s42 = scalar_select %p41, 0, %s40
      %s43 = sadd.s32 1, %s27
      %s44 = scalar_select %p41, %s43, %s27
      %p45 = scmp.ge.s32.totalorder %s44, 2
      %s46 = scalar_select %p45, 0, %s44
      %s47 = sadd.s32 %s28, %s29
      %s48 = sadd.s32 %s42, %s38
      %s49 = ssub.s32 %s27, %s46
      %s50 = ssub.s32 %s47, %s48
      %s51 = sor.u32 %s49, %s50
      %p52 = scmp.eq.s32.totalorder %s51, 0
      %s54 = sadd.s32 %s53, 1
      %s55 = scalar_select %p52, %s53, %s54
      %p58 = pneg %p52
      %p59 = scmp.eq.s32.totalorder %s20, 1
      %p60 = por %p58, %p59
      %p61 = scmp.ne.s32.totalorder %s53, %s56
      %p62 = scmp.eq.s32.totalorder %s20, 0
      %p63 = por %p61, %p62
      %p64 = scmp.ne.s32.totalorder %s53, %s56
      %p65 = scmp.eq.s32.totalorder %s25, 1
      %p66 = por %p64, %p65
      %p67 = scmp.ne.s32.totalorder %s56, %s57
      %p68 = scmp.eq.s32.totalorder %s25, 0
      %p69 = por %p67, %p68
      %p70 = scmp.ne.s32.totalorder %s56, %s57
      %p71 = scmp.eq.s32.totalorder %s26, 1
      %p72 = por %p70, %p71
      %p74 = scmp.ne.s32.totalorder %s57, %s73
      %p75 = scmp.eq.s32.totalorder %s26, 0
      %p76 = por %p74, %p75
      %s77 = ssub.s32 %s27, %s46
      %p78 = scmp.eq.s32.totalorder %s77, 0
      %s80 = sadd.s32 %s79, 1
      %s81 = scalar_select %p78, %s79, %s80
      %p84 = pneg %p78
      %p85 = scmp.eq.s32.totalorder %s20, 1
      %p86 = por %p84, %p85
      %p87 = scmp.ne.s32.totalorder %s79, %s82
      %p88 = scmp.eq.s32.totalorder %s20, 0
      %p89 = por %p87, %p88
      %p90 = scmp.ne.s32.totalorder %s79, %s82
      %p91 = scmp.eq.s32.totalorder %s25, 1
      %p92 = por %p90, %p91
      %p93 = scmp.ne.s32.totalorder %s82, %s83
      %p94 = scmp.eq.s32.totalorder %s25, 0
      %p95 = por %p93, %p94
      %p96 = scmp.ne.s32.totalorder %s82, %s83
      %p97 = scmp.eq.s32.totalorder %s26, 1
      %p98 = por %p96, %p97
      %p100 = scmp.ne.s32.totalorder %s83, %s99
      %p101 = scmp.eq.s32.totalorder %s26, 0
      %p102 = por %p100, %p101
      %s103 = ssub.s32 %s27, %s46
      %p104 = scmp.eq.s32.totalorder %s103, 0
      %s106 = sadd.s32 %s105, 1
      %s107 = scalar_select %p104, %s105, %s106
      %p110 = pneg %p104
      %p111 = scmp.eq.s32.totalorder %s20, 1
      %p112 = por %p110, %p111
      %p113 = scmp.ne.s32.totalorder %s105, %s108
      %p114 = scmp.eq.s32.totalorder %s20, 0
      %p115 = por %p113, %p114
      %p116 = scmp.ne.s32.totalorder %s105, %s108
      %p117 = scmp.eq.s32.totalorder %s25, 1
      %p118 = por %p116, %p117
      %p119 = scmp.ne.s32.totalorder %s108, %s109
      %p120 = scmp.eq.s32.totalorder %s25, 0
      %p121 = por %p119, %p120
      %p122 = scmp.ne.s32.totalorder %s108, %s109
      %p123 = scmp.eq.s32.totalorder %s26, 1
      %p124 = por %p122, %p123
      %p126 = scmp.ne.s32.totalorder %s109, %s125
      %p127 = scmp.eq.s32.totalorder %s26, 0
      %p128 = por %p126, %p127
      %s129 = ssub.s32 %s27, %s46
      %p130 = scmp.eq.s32.totalorder %s129, 0
      %s132 = sadd.s32 %s131, 1
      %s133 = scalar_select %p130, %s131, %s132
      %p136 = pneg %p130
      %p137 = scmp.eq.s32.totalorder %s20, 1
      %p138 = por %p136, %p137
      %p139 = scmp.ne.s32.totalorder %s131, %s134
      %p140 = scmp.eq.s32.totalorder %s20, 0
      %p141 = por %p139, %p140
      %p142 = scmp.ne.s32.totalorder %s131, %s134
      %p143 = scmp.eq.s32.totalorder %s25, 1
      %p144 = por %p142, %p143
      %p145 = scmp.ne.s32.totalorder %s134, %s135
      %p146 = scmp.eq.s32.totalorder %s25, 0
      %p147 = por %p145, %p146
      %p148 = scmp.ne.s32.totalorder %s134, %s135
      %p149 = scmp.eq.s32.totalorder %s26, 1
      %p150 = por %p148, %p149
      %p152 = scmp.ne.s32.totalorder %s135, %s151
      %p153 = scmp.eq.s32.totalorder %s26, 0
      %p154 = por %p152, %p153
      %s155 = ssub.s32 %s28, %s42
      %s156 = ssub.s32 %s27, %s46
      %s157 = sor.u32 %s155, %s156
      %p158 = scmp.eq.s32.totalorder %s157, 0
      %s160 = sadd.s32 %s159, 1
      %s161 = scalar_select %p158, %s159, %s160
      %p164 = pneg %p158
      %p165 = scmp.eq.s32.totalorder %s20, 1
      %p166 = por %p164, %p165
      %p167 = scmp.ne.s32.totalorder %s159, %s162
      %p168 = scmp.eq.s32.totalorder %s20, 0
      %p169 = por %p167, %p168
      %p170 = scmp.ne.s32.totalorder %s159, %s162
      %p171 = scmp.eq.s32.totalorder %s25, 1
      %p172 = por %p170, %p171
      %p173 = scmp.ne.s32.totalorder %s162, %s163
      %p174 = scmp.eq.s32.totalorder %s25, 0
      %p175 = por %p173, %p174
      %p176 = scmp.ne.s32.totalorder %s162, %s163
      %p177 = scmp.eq.s32.totalorder %s26, 1
      %p178 = por %p176, %p177
      %p180 = scmp.ne.s32.totalorder %s163, %s179
      %p181 = scmp.eq.s32.totalorder %s26, 0
      %p182 = por %p180, %p181
      %p183 = scmp.le.s32.totalorder 1, %s20
      %p184 = scmp.lt.s32.totalorder %s20, 3
      %p185 = pnand %p183, %p184
      %p186 = pneg %p185
      // Predicated region
      $region9: #{tpu_custom_call.1} parent=5 // pred_check
        _
      $region10: #{tpu_custom_call.1} parent=5 // pred_check_branch
        %188 = sbr.rel (%p185) target = $region12
      $region11: #{tpu_custom_call.1} parent=5 // pred_region
        %s189 = ssub.s32 %s20, 1
        // Predicated region
        $region13: #{tpu_custom_call.1} parent=11 // pred_check
          %p190 = pneg %p147
        $region14: #{tpu_custom_call.1} parent=11 // pred_check_branch
          %192 = sbr.rel (%p190) target = $region16
        $region15: #{tpu_custom_call.1} parent=11 // pred_region
          %s194 = ssub.s32 2048, 2048
          %195 = vsyncadd [#allocation9], %s194
          %s196 = smul.addr %s30, 16
          %s197 = smul.addr %s196, 128
          %s198 = scalar_lea.hbm %s3, %s197
          %s199 = sshll.u32 [#allocation8], 4
          %s200 = int_to_ptr.vmem [resolvable:$true] %s199
          %205 = dma.hbm_to_vmem [thread:$0]  %s198, 2048, %s200, [#allocation9], 128, 128, 8
        $region16: #{tpu_custom_call.1} parent=11 // pred_fallthru
          _
      $region12: #{tpu_custom_call.1} parent=5 // pred_fallthru
        _
      %p206 = scmp.lt.s32.totalorder %s20, 2
      // Predicated region
      $region17: #{tpu_custom_call.1} parent=5 // pred_check
        %p207 = pneg %p206
      $region18: #{tpu_custom_call.1} parent=5 // pred_check_branch
        %209 = sbr.rel (%p207) target = $region20
      $region19: #{tpu_custom_call.1} parent=5 // pred_region
        // Predicated region
        $region21: #{tpu_custom_call.1} parent=19 // pred_check
          %p210 = pneg %p63
        $region22: #{tpu_custom_call.1} parent=19 // pred_check_branch
          %212 = sbr.rel (%p210) target = $region24
        $region23: #{tpu_custom_call.1} parent=19 // pred_region
          %s213 = sand.u32 %s53, 1
          %s214 = scalar_lea.sflag [#allocation3], %s213
          %s215 = sand.u32 %s53, 1
          %s216 = smul.addr %s215, 4
          %s217 = scalar_lea.vmem [#allocation2], %s216
          %s218 = sadd.s32 %s28, %s29
          %s219 = smul.u32 2, %s218
          %s221 = ssub.s32 64, 64
          %222 = vsyncadd %s214, %s221
          %s223 = smul.addr %s27, 2
          %s224 = sadd.s32 %s219, %s223
          %s225 = smul.addr %s224, 32
          %s226 = scalar_lea.hbm %s0, %s225
          %s227 = sshll.u32 %s217, 4
          %s228 = int_to_ptr.vmem [resolvable:$true] %s227
          %233 = dma.hbm_to_vmem [thread:$0]  %s226, 64, %s228, %s214, 32, 32, 2
        $region24: #{tpu_custom_call.1} parent=19 // pred_fallthru
          _
        // Predicated region
        $region25: #{tpu_custom_call.1} parent=19 // pred_check
          %p234 = pneg %p89
        $region26: #{tpu_custom_call.1} parent=19 // pred_check_branch
          %236 = sbr.rel (%p234) target = $region28
        $region27: #{tpu_custom_call.1} parent=19 // pred_region
          %s237 = sand.u32 %s20, 1
          %s238 = scalar_lea.sflag [#allocation6], %s237
          %s239 = sand.u32 %s79, 1
          %s240 = scalar_lea.vmem [#allocation5], %s239
          %s242 = ssub.s32 16, 16
          %243 = vsyncadd %s238, %s242
          %s244 = smul.addr %s27, 16
          %s245 = scalar_lea.hbm %s1, %s244
          %s247 = sshll.u32 %s240, 4
          %s248 = int_to_ptr.vmem [resolvable:$true] %s247
          %250 = dma.hbm_to_vmem [thread:$0]  %s245, 16, %s248, %s238
        $region28: #{tpu_custom_call.1} parent=19 // pred_fallthru
          _
        // Predicated region
        $region29: #{tpu_custom_call.1} parent=19 // pred_check
          %p251 = pneg %p115
        $region30: #{tpu_custom_call.1} parent=19 // pred_check_branch
          %253 = sbr.rel (%p251) target = $region32
        $region31: #{tpu_custom_call.1} parent=19 // pred_region
          %s254 = sand.u32 %s20, 1
          %s255 = scalar_lea.sflag [#allocation6], %s254
          %s256 = sand.u32 %s105, 1
          %s257 = scalar_lea.vmem [#allocation7], %s256
          %s259 = ssub.s32 16, 16
          %260 = vsyncadd %s255, %s259
          %s261 = smul.addr %s27, 16
          %s262 = scalar_lea.hbm %s2, %s261
          %s264 = sshll.u32 %s257, 4
          %s265 = int_to_ptr.vmem [resolvable:$true] %s264
          %267 = dma.hbm_to_vmem [thread:$0]  %s262, 16, %s265, %s255
        $region32: #{tpu_custom_call.1} parent=19 // pred_fallthru
          _
      $region20: #{tpu_custom_call.1} parent=5 // pred_fallthru
        _
      %p268 = scmp.le.s32.totalorder 1, %s20
      %p269 = scmp.lt.s32.totalorder %s20, 3
      %p270 = pnand %p268, %p269
      %p271 = pneg %p270
      // Predicated region
      $region33: #{tpu_custom_call.1} parent=5 // pred_check
        _
      $region34: #{tpu_custom_call.1} parent=5 // pred_check_branch
        %273 = sbr.rel (%p270) target = $region36
      $region35: #{tpu_custom_call.1} parent=5 // pred_region
        %s274 = ssub.s32 %s20, 1
        %s275 = sand.u32 %s56, 1
        %s276 = scalar_lea.sflag [#allocation3], %s275
        %s277 = sand.u32 %s56, 1
        %s278 = smul.addr %s277, 4
        %s279 = scalar_lea.vmem [#allocation2], %s278
        // Predicated region
        $region37: #{tpu_custom_call.1} parent=35 // pred_check
          %p280 = pneg %p69
        $region38: #{tpu_custom_call.1} parent=35 // pred_check_branch
          %282 = sbr.rel (%p280) target = $region40
        $region39: #{tpu_custom_call.1} parent=35 // pred_region
          %283 = dma.done %s276, 64
        $region40: #{tpu_custom_call.1} parent=35 // pred_fallthru
          _
        %s284 = sand.u32 %s25, 1
        %s285 = scalar_lea.sflag [#allocation6], %s284
        %s286 = sand.u32 %s82, 1
        %s287 = scalar_lea.vmem [#allocation5], %s286
        // Predicated region
        $region41: #{tpu_custom_call.1} parent=35 // pred_check
          %p288 = pneg %p95
        $region42: #{tpu_custom_call.1} parent=35 // pred_check_branch
          %290 = sbr.rel (%p288) target = $region44
        $region43: #{tpu_custom_call.1} parent=35 // pred_region
          %291 = dma.done %s285, 16
        $region44: #{tpu_custom_call.1} parent=35 // pred_fallthru
          _
        %s292 = sand.u32 %s25, 1
        %s293 = scalar_lea.sflag [#allocation6], %s292
        %s294 = sand.u32 %s108, 1
        %s295 = scalar_lea.vmem [#allocation7], %s294
        // Predicated region
        $region45: #{tpu_custom_call.1} parent=35 // pred_check
          %p296 = pneg %p121
        $region46: #{tpu_custom_call.1} parent=35 // pred_check_branch
          %298 = sbr.rel (%p296) target = $region48
        $region47: #{tpu_custom_call.1} parent=35 // pred_region
          %299 = dma.done %s293, 16
        $region48: #{tpu_custom_call.1} parent=35 // pred_fallthru
          _
        // Predicated region
        $region49: #{tpu_custom_call.1} parent=35 // pred_check
          %p300 = pneg %p147
        $region50: #{tpu_custom_call.1} parent=35 // pred_check_branch
          %302 = sbr.rel (%p300) target = $region52
        $region51: #{tpu_custom_call.1} parent=35 // pred_region
          %303 = dma.done [#allocation9], 2048
        $region52: #{tpu_custom_call.1} parent=35 // pred_fallthru
          _
        %s304 = sand.u32 %s56, 1
        %s305 = scalar_lea.sflag [#allocation3], %s304
        %s306 = sand.u32 %s56, 1
        %s307 = smul.addr %s306, 4
        %s308 = scalar_lea.vmem [#allocation2], %s307
        %p309 = pneg %p69
        %p310 = pneg %p66
        %s311 = sand.u32 %s25, 1
        %s312 = scalar_lea.sflag [#allocation6], %s311
        %s313 = sand.u32 %s82, 1
        %s314 = scalar_lea.vmem [#allocation5], %s313
        %p315 = pneg %p95
        %p316 = pneg %p92
        %s317 = sand.u32 %s25, 1
        %s318 = scalar_lea.sflag [#allocation6], %s317
        %s319 = sand.u32 %s108, 1
        %s320 = scalar_lea.vmem [#allocation7], %s319
        %p321 = pneg %p121
        %p322 = pneg %p118
        %p323 = pneg %p147
        %p324 = pneg %p144
        %p325 = pneg %p175
        %p326 = pneg %p172
        %s327 = sand.u32 %s162, 1
        %s328 = scalar_lea.sflag [#allocation4], %s327
        %s329 = sand.u32 %s162, 1
        %s330 = smul.addr %s329, 8
        %s331 = scalar_lea.vmem [#allocation10], %s330
        %s332 = sadd.s32 %s31, %s32
        %s333 = smul.u32 2, %s332
        %p334 = scmp.eq.s32.totalorder %s32, 0
        // Predicated region
        $region53: #{tpu_custom_call.1} parent=35 // pred_check
          %p335 = pneg %p334
        $region54: #{tpu_custom_call.1} parent=35 // pred_check_branch
          %337 = sbr.rel (%p335) target = $region56
        $region55: #{tpu_custom_call.1} parent=35 // pred_region
          %338 = vst [vmem:[%s331] sm:$0xff] 0.0
        $region56: #{tpu_custom_call.1} parent=35 // pred_fallthru
          _
        %v339 = vld [vmem:[%s279] sm:$0x3]
        %v340 = vld [vmem:[%s279 + $0x2] sm:$0x3]
        %v341 = vunpack.c.0.s8 %v339
        %v342 = vunpack.c.0.s8 %v340
        %v343 = vcvt.s32.f32 %v341
        %v344 = vcvt.s32.f32 %v342
        %v345 = vld [vmem:[#allocation8] sm:$0xff]
        %v346 = vld [vmem:[#allocation8 + $0x8] sm:$0xff]
        %v347 = vld [vmem:[#allocation8 + $0x10] sm:$0xff]
        %v348 = vld [vmem:[#allocation8 + $0x18] sm:$0xff]
        %v349 = vld [vmem:[#allocation8 + $0x20] sm:$0xff]
        %v350 = vld [vmem:[#allocation8 + $0x28] sm:$0xff]
        %v351 = vld [vmem:[#allocation8 + $0x30] sm:$0xff]
        %v352 = vld [vmem:[#allocation8 + $0x38] sm:$0xff]
        %v353 = vld [vmem:[#allocation8 + $0x40] sm:$0xff]
        %v354 = vld [vmem:[#allocation8 + $0x48] sm:$0xff]
        %v355 = vld [vmem:[#allocation8 + $0x50] sm:$0xff]
        %v356 = vld [vmem:[#allocation8 + $0x58] sm:$0xff]
        %v357 = vld [vmem:[#allocation8 + $0x60] sm:$0xff]
        %v358 = vld [vmem:[#allocation8 + $0x68] sm:$0xff]
        %v359 = vld [vmem:[#allocation8 + $0x70] sm:$0xff]
        %v360 = vld [vmem:[#allocation8 + $0x78] sm:$0xff]
        %v361 = vld [vmem:[%s287] sm:$0x1]
        %v362 = vld [vmem:[%s295] sm:$0x1]
        %363 = vmatprep.subr.mxu0 0.0
        %364 = vmatpush1.msra.mxu0 %v345
        %365 = vmatprep.subr.mxu0 0.0
        %366 = vmatpush1.msra.mxu0 %v346
        %367 = vmatprep.subr.mxu0 0.0
        %368 = vmatpush1.msra.mxu0 %v347
        %369 = vmatprep.subr.mxu0 0.0
        %370 = vmatpush1.msra.mxu0 %v348
        %371 = vmatprep.subr.mxu0 0.0
        %372 = vmatpush1.msra.mxu0 %v349
        %373 = vmatprep.subr.mxu0 0.0
        %374 = vmatpush1.msra.mxu0 %v350
        %375 = vmatprep.subr.mxu0 0.0
        %376 = vmatpush1.msra.mxu0 %v351
        %377 = vmatprep.subr.mxu0 0.0
        %378 = vmatpush1.msra.mxu0 %v352
        %379 = vmatprep.subr.mxu0 0.0
        %380 = vmatpush1.msra.mxu0 %v353
        %381 = vmatprep.subr.mxu0 0.0
        %382 = vmatpush1.msra.mxu0 %v354
        %383 = vmatprep.subr.mxu0 0.0
        %384 = vmatpush1.msra.mxu0 %v355
        %385 = vmatprep.subr.mxu0 0.0
        %386 = vmatpush1.msra.mxu0 %v356
        %387 = vmatprep.subr.mxu0 0.0
        %388 = vmatpush1.msra.mxu0 %v357
        %389 = vmatprep.subr.mxu0 0.0
        %390 = vmatpush1.msra.mxu0 %v358
        %391 = vmatprep.subr.mxu0 0.0
        %392 = vmatpush1.msra.mxu0 %v359
        %393 = vmatprep.subr.mxu0 0.0
        %394 = vmatpush1.msra.mxu0 %v360
        %395 = vmatprep.subr.mxu0 0.0
        %396 = vmatpush1.msra.mxu0 0.0
        %397 = vmatprep.subr.mxu0 0.0
        %398 = vmatpush1.msra.mxu0 0.0
        %399 = vmatprep.subr.mxu0 0.0
        %400 = vmatpush1.msra.mxu0 0.0
        %401 = vmatprep.subr.mxu0 0.0
        %402 = vmatpush1.msra.mxu0 0.0
        %403 = vmatprep.subr.mxu0 0.0
        %404 = vmatpush1.msra.mxu0 0.0
        %405 = vmatprep.subr.mxu0 0.0
        %406 = vmatpush1.msra.mxu0 0.0
        %407 = vmatprep.subr.mxu0 0.0
        %408 = vmatpush1.msra.mxu0 0.0
        %409 = vmatprep.subr.mxu0 0.0
        %410 = vmatpush1.msra.mxu0 0.0
        %411 = vmatprep.subr.mxu0 0.0
        %412 = vmatpush1.msra.mxu0 0.0
        %413 = vmatprep.subr.mxu0 0.0
        %414 = vmatpush1.msra.mxu0 0.0
        %415 = vmatprep.subr.mxu0 0.0
        %416 = vmatpush1.msra.mxu0 0.0
        %417 = vmatprep.subr.mxu0 0.0
        %418 = vmatpush1.msra.mxu0 0.0
        %419 = vmatprep.subr.mxu0 0.0
        %420 = vmatpush1.msra.mxu0 0.0
        %421 = vmatprep.subr.mxu0 0.0
        %422 = vmatpush1.msra.mxu0 0.0
        %423 = vmatprep.subr.mxu0 0.0
        %424 = vmatpush1.msra.mxu0 0.0
        %425 = vmatprep.subr.mxu0 0.0
        %426 = vmatpush1.msra.mxu0 0.0
        %427 = vmatprep.mubr.f32.mxu0 0.0
        %428 = vmatmul.mubr.f32.gmra.mrb[0].mxu0 %v343
        %v429 = vpop.f32.mrb[0].mxu0
        %v430 = vadd.f32 0.0, %v429
        %v431 = vpop.f32.mrb[0].mxu0
        %432 = vmatprep.mubr.f32.mxu0 0.0
        %433 = vmatmul.mubr.f32.gmra.mrb[0].mxu0 %v344
        %v434 = vpop.f32.mrb[0].mxu0
        %v435 = vadd.f32 0.0, %v434
        %v436 = vpop.f32.mrb[0].mxu0
        %437 = vdwg.mxu0
        %v439 = vlaneseq
        %v440 = vshrl.u32 %v439, 7
        %v441 = vsub.s32 0, %v440
        %v442 = vrot.slane %v361, %v441
        %v444 = vadd.f32 %v442, %v430
        %v445 = vadd.f32 %v442, %v435
        %v447 = vlaneseq
        %v448 = vshrl.u32 %v447, 7
        %v449 = vsub.s32 0, %v448
        %v450 = vrot.slane %v362, %v449
        %v452 = vmul.f32 %v343, %v450
        %v453 = vmul.f32 %v344, %v450
        %v454 = vsub.f32 %v444, %v452
        %v455 = vsub.f32 %v445, %v453
        %v456 = vmul.f32 %v343, %v454
        %v457 = vmul.f32 %v344, %v455
        %v458 = vand.u32 2147483647, %v456
        %v459 = vand.u32 2147483647, %v457
        %v460 = vsub.f32 0.0, %v458
        %v461 = vsub.f32 0.0, %v459
        %v462 = vmul.f32 %v460, 1.442695
        %v463 = vpow.pop %v462
        %v464 = vmul.f32 %v461, 1.442695
        %v465 = vpow.pop %v464
        %v466 = vadd.f32 %v463, 1.0
        %v467 = vlog2.pop %v466
        %v468 = vmul.f32 %v467, 0.6931472
        %v469 = vmul.f32 -0.5, %v463
        %v470 = vadd.f32 %v469, 1.0
        %v471 = vmul.f32 %v470, %v463
        %v472 = vand.u32 2147483647, %v463
        %vm473 = vcmp.lt.f32.partialorder %v472, 0.0004427343
        %v474 = vsel %vm473, %v471, %v468
        %v475 = vadd.f32 %v465, 1.0
        %v476 = vlog2.pop %v475
        %v477 = vmul.f32 %v476, 0.6931472
        %v478 = vmul.f32 -0.5, %v465
        %v479 = vadd.f32 %v478, 1.0
        %v480 = vmul.f32 %v479, %v465
        %v481 = vand.u32 2147483647, %v465
        %vm482 = vcmp.lt.f32.partialorder %v481, 0.0004427343
        %v483 = vsel %vm482, %v480, %v477
        %v484 = vmin.f32 %v456, 0.0
        %v485 = vmin.f32 %v457, 0.0
        %v486 = vsub.f32 %v484, %v474
        %v487 = vsub.f32 %v485, %v483
        %v488 = vlaneseq
        %v489 = vand.u32 %v488, 127
        %vm490 = vcmp.lt.s32.totalorder %v489, 32
        %v491 = vsel %vm490, %v486, 0.0
        %v492 = vsel %vm490, %v487, 0.0
        %v493 = vld [vmem:[%s331] sm:$0xff]
        %v494 = vadd.f32 %v491, %v492
        %v495 = vadd.f32 %v493, %v494
        %496 = vst [vmem:[%s331] sm:$0xff] %v495
        %s497 = sand.u32 %s162, 1
        %s498 = scalar_lea.sflag [#allocation4], %s497
        %s499 = sand.u32 %s162, 1
        %s500 = smul.addr %s499, 8
        %s501 = scalar_lea.vmem [#allocation10], %s500
        // Predicated region
        $region57: #{tpu_custom_call.1} parent=35 // pred_check
          %p502 = pneg %p172
        $region58: #{tpu_custom_call.1} parent=35 // pred_check_branch
          %504 = sbr.rel (%p502) target = $region60
        $region59: #{tpu_custom_call.1} parent=35 // pred_region
          %s506 = ssub.s32 128, 128
          %507 = vsyncadd %s498, %s506
          %s508 = smul.addr %s31, 2
          %s509 = sadd.s32 %s30, %s508
          %s510 = smul.addr %s509, 128
          %s511 = scalar_lea.hbm %s4, %s510
          %s513 = sshll.u32 %s501, 4
          %s514 = int_to_ptr.vmem [resolvable:$true] %s513
          %516 = dma.vmem_to_hbm [thread:$0]  %s514, 128, %s511, %s498
        $region60: #{tpu_custom_call.1} parent=35 // pred_fallthru
          _
      $region36: #{tpu_custom_call.1} parent=5 // pred_fallthru
        _
      %p517 = scmp.le.s32.totalorder 2, %s20
      // Predicated region
      $region61: #{tpu_custom_call.1} parent=5 // pred_check
        %p518 = pneg %p517
      $region62: #{tpu_custom_call.1} parent=5 // pred_check_branch
        %520 = sbr.rel (%p518) target = $region64
      $region63: #{tpu_custom_call.1} parent=5 // pred_region
        %s521 = ssub.s32 %s20, 2
        // Predicated region
        $region65: #{tpu_custom_call.1} parent=63 // pred_check
          %p522 = pneg %p178
        $region66: #{tpu_custom_call.1} parent=63 // pred_check_branch
          %524 = sbr.rel (%p522) target = $region68
        $region67: #{tpu_custom_call.1} parent=63 // pred_region
          %s525 = sand.u32 %s163, 1
          %s526 = scalar_lea.sflag [#allocation4], %s525
          %s527 = sand.u32 %s163, 1
          %s528 = smul.addr %s527, 8
          %s529 = scalar_lea.vmem [#allocation10], %s528
          %530 = dma.done %s526, 128
        $region68: #{tpu_custom_call.1} parent=63 // pred_fallthru
          _
      $region64: #{tpu_custom_call.1} parent=5 // pred_fallthru
        _
    $region6: #{tpu_custom_call.1} parent=1 // loop_footer
      %s24 = sadd.s32 1, %s20
    $region7: #{tpu_custom_call.1} parent=1 // loop_footer_branch
      %19 = sbr.rel target = $region3
    $region8: #{tpu_custom_call.1} parent=1 // loop_exit
      _
    %531 = vsyncpa [#allocation3], 1
    %s532 = scalar_lea.sflag [#allocation3], 1
    %533 = vsyncpa %s532, 1
    %534 = vsyncpa [#allocation6], 1
    %s535 = scalar_lea.sflag [#allocation6], 1
    %536 = vsyncpa %s535, 1
    %537 = vsyncpa [#allocation9], 1
    %538 = vsyncpa [#allocation4], 1
    %s539 = scalar_lea.sflag [#allocation4], 1
    %540 = vsyncpa %s539, 1

// kernel: tpu_custom_call.1
$region0: #{tpu_custom_call.1}
  #allocation0 [shape = 'u32[]', space=smem, size = 0x4, offset = 0x4, fixed_abs, tag = 'smem constant byte address 0x4 - core index']
  #allocation1 [shape = 'u32[144,128]{1,0:T(1,128)}', space=vmem, size = 0x12000, scoped, tag = 'internal scratch']
  %s0 = inlined_call_operand.hbm [shape: s8[2,16,128], index: 0, kind: input, shape index: {}]
  %s1 = inlined_call_operand.hbm [shape: f32[2,1,128], index: 1, kind: input, shape index: {}]
  %s2 = inlined_call_operand.hbm [shape: f32[2,1,128], index: 2, kind: input, shape index: {}]
  %s3 = inlined_call_operand.hbm [shape: f32[2,128,128], index: 3, kind: input, shape index: {}]
  %s4 = inlined_call_operand.hbm [shape: f32[1,2,8,128], index: 4, kind: output, shape index: {}]
  %s5 = sld [smem:[#allocation0]]
  $region69: #{tpu_custom_call.1} parent=0
    _
  %s7 = ssub.s32 1, %s5
  %s8 = scalar_select 0, %s7, %s5
  $region1: #{tpu_custom_call.1} parent=0
    #allocation2 [shape = 'u8[4096]{0}', space=vmem, size = 0x1000, scoped, tag = 'input window, operand 0']
    #allocation3 [shape = 's32[2]{0}', space=sflag, size = 0x8, scoped, tag = 'scoped memory for tpu_custom_call.1']
    #allocation4 [shape = 's32[2]{0}', space=sflag, size = 0x8, scoped, tag = 'scoped memory for tpu_custom_call.1']
    #allocation5 [shape = 'u8[1024]{0}', space=vmem, size = 0x400, scoped, tag = 'input window, operand 1']
    #allocation6 [shape = 's32[2]{0}', space=sflag, size = 0x8, scoped, tag = 'scoped memory for tpu_custom_call.1']
    #allocation7 [shape = 'u8[1024]{0}', space=vmem, size = 0x400, scoped, tag = 'input window, operand 2']
    #allocation8 [shape = 'u8[131072]{0}', space=vmem, size = 0x20000, scoped, tag = 'input window, operand 3']
    #allocation9 [shape = 's32[2]{0}', space=sflag, size = 0x8, scoped, tag = 'scoped memory for tpu_custom_call.1']
    #allocation10 [shape = 'u8[8192]{0}', space=vmem, size = 0x2000, scoped, tag = 'output window, operand 0']
    %9 = vsyncpa [#allocation3], 0
    %s10 = scalar_lea.sflag [#allocation3], 1
    %11 = vsyncpa %s10, 0
    %12 = vsyncpa [#allocation6], 0
    %s13 = scalar_lea.sflag [#allocation6], 1
    %14 = vsyncpa %s13, 0
    %15 = vsyncpa [#allocation9], 0
    %s16 = scalar_lea.sflag [#allocation9], 1
    %17 = vsyncpa %s16, 0
    %18 = vsyncpa [#allocation4], 0
    %s19 = scalar_lea.sflag [#allocation4], 1
    %20 = vsyncpa %s19, 0
    loop: start=0, step=1, limit=4
    $region2: #{tpu_custom_call.1} parent=1 // loop_pre_header
      _
    $region3: #{tpu_custom_call.1} parent=1 // loop_header
      %s22 = sphi 0, %s26
      %p23 = scmp.ge.s32.totalorder %s22, 4
      %s29 = sphi 0, %s48
      %s30 = sphi 0, %s44
      %s31 = sphi 0, %s40
      %s32 = sphi 0, %s29
      %s33 = sphi 0, %s30
      %s34 = sphi 0, %s31
      %s35 = sphi 0, %s32
      %s36 = sphi 0, %s33
      %s37 = sphi 0, %s34
      %s55 = sphi 0, %s57
      %s58 = sphi 0, %s55
      %s59 = sphi 0, %s58
      %s75 = sphi 0, %s59
      %s81 = sphi 0, %s83
      %s84 = sphi 0, %s81
      %s85 = sphi 0, %s84
      %s101 = sphi 0, %s85
      %s107 = sphi 0, %s109
      %s110 = sphi 0, %s107
      %s111 = sphi 0, %s110
      %s127 = sphi 0, %s111
      %s133 = sphi 0, %s135
      %s136 = sphi 0, %s133
      %s137 = sphi 0, %s136
      %s153 = sphi 0, %s137
      %s161 = sphi 0, %s163
      %s164 = sphi 0, %s161
      %s165 = sphi 0, %s164
      %s181 = sphi 0, %s165
    $region4: #{tpu_custom_call.1} parent=1 // loop_header_branch
      %25 = sbr.rel (%p23) target = $region8
    $region5: #{tpu_custom_call.1} parent=1 // loop_body
      %s27 = ssub.s32 %s22, 1
      %s28 = ssub.s32 %s22, 2
      %s38 = sadd.s32 1, %s31
      %p39 = scmp.ge.s32.totalorder %s38, 1
      %s40 = scalar_select %p39, 0, %s38
      %s41 = sadd.s32 1, %s30
      %s42 = scalar_select %p39, %s41, %s30
      %p43 = scmp.ge.s32.totalorder %s42, 1
      %s44 = scalar_select %p43, 0, %s42
      %s45 = sadd.s32 1, %s29
      %s46 = scalar_select %p43, %s45, %s29
      %p47 = scmp.ge.s32.totalorder %s46, 2
      %s48 = scalar_select %p47, 0, %s46
      %s49 = sadd.s32 %s30, %s31
      %s50 = sadd.s32 %s44, %s40
      %s51 = ssub.s32 %s29, %s48
      %s52 = ssub.s32 %s49, %s50
      %s53 = sor.u32 %s51, %s52
      %p54 = scmp.eq.s32.totalorder %s53, 0
      %s56 = sadd.s32 %s55, 1
      %s57 = scalar_select %p54, %s55, %s56
      %p60 = pneg %p54
      %p61 = scmp.eq.s32.totalorder %s22, 1
      %p62 = por %p60, %p61
      %p63 = scmp.ne.s32.totalorder %s55, %s58
      %p64 = scmp.eq.s32.totalorder %s22, 0
      %p65 = por %p63, %p64
      %p66 = scmp.ne.s32.totalorder %s55, %s58
      %p67 = scmp.eq.s32.totalorder %s27, 1
      %p68 = por %p66, %p67
      %p69 = scmp.ne.s32.totalorder %s58, %s59
      %p70 = scmp.eq.s32.totalorder %s27, 0
      %p71 = por %p69, %p70
      %p72 = scmp.ne.s32.totalorder %s58, %s59
      %p73 = scmp.eq.s32.totalorder %s28, 1
      %p74 = por %p72, %p73
      %p76 = scmp.ne.s32.totalorder %s59, %s75
      %p77 = scmp.eq.s32.totalorder %s28, 0
      %p78 = por %p76, %p77
      %s79 = ssub.s32 %s29, %s48
      %p80 = scmp.eq.s32.totalorder %s79, 0
      %s82 = sadd.s32 %s81, 1
      %s83 = scalar_select %p80, %s81, %s82
      %p86 = pneg %p80
      %p87 = scmp.eq.s32.totalorder %s22, 1
      %p88 = por %p86, %p87
      %p89 = scmp.ne.s32.totalorder %s81, %s84
      %p90 = scmp.eq.s32.totalorder %s22, 0
      %p91 = por %p89, %p90
      %p92 = scmp.ne.s32.totalorder %s81, %s84
      %p93 = scmp.eq.s32.totalorder %s27, 1
      %p94 = por %p92, %p93
      %p95 = scmp.ne.s32.totalorder %s84, %s85
      %p96 = scmp.eq.s32.totalorder %s27, 0
      %p97 = por %p95, %p96
      %p98 = scmp.ne.s32.totalorder %s84, %s85
      %p99 = scmp.eq.s32.totalorder %s28, 1
      %p100 = por %p98, %p99
      %p102 = scmp.ne.s32.totalorder %s85, %s101
      %p103 = scmp.eq.s32.totalorder %s28, 0
      %p104 = por %p102, %p103
      %s105 = ssub.s32 %s29, %s48
      %p106 = scmp.eq.s32.totalorder %s105, 0
      %s108 = sadd.s32 %s107, 1
      %s109 = scalar_select %p106, %s107, %s108
      %p112 = pneg %p106
      %p113 = scmp.eq.s32.totalorder %s22, 1
      %p114 = por %p112, %p113
      %p115 = scmp.ne.s32.totalorder %s107, %s110
      %p116 = scmp.eq.s32.totalorder %s22, 0
      %p117 = por %p115, %p116
      %p118 = scmp.ne.s32.totalorder %s107, %s110
      %p119 = scmp.eq.s32.totalorder %s27, 1
      %p120 = por %p118, %p119
      %p121 = scmp.ne.s32.totalorder %s110, %s111
      %p122 = scmp.eq.s32.totalorder %s27, 0
      %p123 = por %p121, %p122
      %p124 = scmp.ne.s32.totalorder %s110, %s111
      %p125 = scmp.eq.s32.totalorder %s28, 1
      %p126 = por %p124, %p125
      %p128 = scmp.ne.s32.totalorder %s111, %s127
      %p129 = scmp.eq.s32.totalorder %s28, 0
      %p130 = por %p128, %p129
      %s131 = ssub.s32 %s29, %s48
      %p132 = scmp.eq.s32.totalorder %s131, 0
      %s134 = sadd.s32 %s133, 1
      %s135 = scalar_select %p132, %s133, %s134
      %p138 = pneg %p132
      %p139 = scmp.eq.s32.totalorder %s22, 1
      %p140 = por %p138, %p139
      %p141 = scmp.ne.s32.totalorder %s133, %s136
      %p142 = scmp.eq.s32.totalorder %s22, 0
      %p143 = por %p141, %p142
      %p144 = scmp.ne.s32.totalorder %s133, %s136
      %p145 = scmp.eq.s32.totalorder %s27, 1
      %p146 = por %p144, %p145
      %p147 = scmp.ne.s32.totalorder %s136, %s137
      %p148 = scmp.eq.s32.totalorder %s27, 0
      %p149 = por %p147, %p148
      %p150 = scmp.ne.s32.totalorder %s136, %s137
      %p151 = scmp.eq.s32.totalorder %s28, 1
      %p152 = por %p150, %p151
      %p154 = scmp.ne.s32.totalorder %s137, %s153
      %p155 = scmp.eq.s32.totalorder %s28, 0
      %p156 = por %p154, %p155
      %s157 = ssub.s32 %s30, %s44
      %s158 = ssub.s32 %s29, %s48
      %s159 = sor.u32 %s157, %s158
      %p160 = scmp.eq.s32.totalorder %s159, 0
      %s162 = sadd.s32 %s161, 1
      %s163 = scalar_select %p160, %s161, %s162
      %p166 = pneg %p160
      %p167 = scmp.eq.s32.totalorder %s22, 1
      %p168 = por %p166, %p167
      %p169 = scmp.ne.s32.totalorder %s161, %s164
      %p170 = scmp.eq.s32.totalorder %s22, 0
      %p171 = por %p169, %p170
      %p172 = scmp.ne.s32.totalorder %s161, %s164
      %p173 = scmp.eq.s32.totalorder %s27, 1
      %p174 = por %p172, %p173
      %p175 = scmp.ne.s32.totalorder %s164, %s165
      %p176 = scmp.eq.s32.totalorder %s27, 0
      %p177 = por %p175, %p176
      %p178 = scmp.ne.s32.totalorder %s164, %s165
      %p179 = scmp.eq.s32.totalorder %s28, 1
      %p180 = por %p178, %p179
      %p182 = scmp.ne.s32.totalorder %s165, %s181
      %p183 = scmp.eq.s32.totalorder %s28, 0
      %p184 = por %p182, %p183
      %p185 = scmp.le.s32.totalorder 1, %s22
      %p186 = scmp.lt.s32.totalorder %s22, 3
      %p187 = pnand %p185, %p186
      %p188 = pneg %p187
      // Predicated region
      $region9: #{tpu_custom_call.1} parent=5 // pred_check
        _
      $region10: #{tpu_custom_call.1} parent=5 // pred_check_branch
        %190 = sbr.rel (%p187) target = $region12
      $region11: #{tpu_custom_call.1} parent=5 // pred_region
        %s191 = ssub.s32 %s22, 1
      $region12: #{tpu_custom_call.1} parent=5 // pred_fallthru
        _
      %p192 = scmp.lt.s32.totalorder %s22, 2
      // Predicated region
      $region13: #{tpu_custom_call.1} parent=5 // pred_check
        %p193 = pneg %p192
      $region14: #{tpu_custom_call.1} parent=5 // pred_check_branch
        %195 = sbr.rel (%p193) target = $region16
      $region15: #{tpu_custom_call.1} parent=5 // pred_region
        // Predicated region
        $region17: #{tpu_custom_call.1} parent=15 // pred_check
          %p196 = pneg %p65
        $region18: #{tpu_custom_call.1} parent=15 // pred_check_branch
          %198 = sbr.rel (%p196) target = $region20
        $region19: #{tpu_custom_call.1} parent=15 // pred_region
          %s199 = sand.u32 %s55, 1
          %s200 = scalar_lea.sflag [#allocation3], %s199
          %s201 = sand.u32 %s55, 1
          %s202 = smul.addr %s201, 4
          %s203 = scalar_lea.vmem [#allocation2], %s202
          %s204 = sadd.s32 %s30, %s31
          %s205 = smul.u32 2, %s204
          %s207 = ssub.s32 64, 64
          %208 = vsyncadd %s200, %s207
          %s209 = smul.addr %s29, 2
          %s210 = sadd.s32 %s205, %s209
          %s211 = smul.addr %s210, 32
          %s212 = scalar_lea.hbm %s0, %s211
          %s213 = sshll.u32 %s203, 4
          %s214 = int_to_ptr.vmem [resolvable:$true] %s213
          %219 = dma.hbm_to_vmem [thread:$0]  %s212, 64, %s214, %s200, 32, 32, 2
        $region20: #{tpu_custom_call.1} parent=15 // pred_fallthru
          _
        // Predicated region
        $region21: #{tpu_custom_call.1} parent=15 // pred_check
          %p220 = pneg %p91
        $region22: #{tpu_custom_call.1} parent=15 // pred_check_branch
          %222 = sbr.rel (%p220) target = $region24
        $region23: #{tpu_custom_call.1} parent=15 // pred_region
          %s223 = sand.u32 %s22, 1
          %s224 = scalar_lea.sflag [#allocation6], %s223
          %s225 = sand.u32 %s81, 1
          %s226 = scalar_lea.vmem [#allocation5], %s225
          %s228 = ssub.s32 16, 16
          %229 = vsyncadd %s224, %s228
          %s230 = smul.addr %s29, 16
          %s231 = scalar_lea.hbm %s1, %s230
          %s233 = sshll.u32 %s226, 4
          %s234 = int_to_ptr.vmem [resolvable:$true] %s233
          %236 = dma.hbm_to_vmem [thread:$0]  %s231, 16, %s234, %s224
        $region24: #{tpu_custom_call.1} parent=15 // pred_fallthru
          _
        // Predicated region
        $region25: #{tpu_custom_call.1} parent=15 // pred_check
          %p237 = pneg %p117
        $region26: #{tpu_custom_call.1} parent=15 // pred_check_branch
          %239 = sbr.rel (%p237) target = $region28
        $region27: #{tpu_custom_call.1} parent=15 // pred_region
          %s240 = sand.u32 %s22, 1
          %s241 = scalar_lea.sflag [#allocation6], %s240
          %s242 = sand.u32 %s107, 1
          %s243 = scalar_lea.vmem [#allocation7], %s242
          %s245 = ssub.s32 16, 16
          %246 = vsyncadd %s241, %s245
          %s247 = smul.addr %s29, 16
          %s248 = scalar_lea.hbm %s2, %s247
          %s250 = sshll.u32 %s243, 4
          %s251 = int_to_ptr.vmem [resolvable:$true] %s250
          %253 = dma.hbm_to_vmem [thread:$0]  %s248, 16, %s251, %s241
        $region28: #{tpu_custom_call.1} parent=15 // pred_fallthru
          _
        // Predicated region
        $region29: #{tpu_custom_call.1} parent=15 // pred_check
          %p254 = pneg %p143
        $region30: #{tpu_custom_call.1} parent=15 // pred_check_branch
          %256 = sbr.rel (%p254) target = $region32
        $region31: #{tpu_custom_call.1} parent=15 // pred_region
          %s257 = sand.u32 %s133, 1
          %s258 = scalar_lea.sflag [#allocation9], %s257
          %s259 = sand.u32 %s133, 1
          %s260 = smul.addr %s259, 128
          %s261 = scalar_lea.vmem [#allocation8], %s260
          %s263 = ssub.s32 2048, 2048
          %264 = vsyncadd %s258, %s263
          %s265 = smul.addr %s29, 16
          %s266 = smul.addr %s265, 128
          %s267 = scalar_lea.hbm %s3, %s266
          %s268 = sshll.u32 %s261, 4
          %s269 = int_to_ptr.vmem [resolvable:$true] %s268
          %274 = dma.hbm_to_vmem [thread:$0]  %s267, 2048, %s269, %s258, 128, 128, 8
        $region32: #{tpu_custom_call.1} parent=15 // pred_fallthru
          _
      $region16: #{tpu_custom_call.1} parent=5 // pred_fallthru
        _
      %p275 = scmp.le.s32.totalorder 1, %s22
      %p276 = scmp.lt.s32.totalorder %s22, 3
      %p277 = pnand %p275, %p276
      %p278 = pneg %p277
      // Predicated region
      $region33: #{tpu_custom_call.1} parent=5 // pred_check
        _
      $region34: #{tpu_custom_call.1} parent=5 // pred_check_branch
        %280 = sbr.rel (%p277) target = $region36
      $region35: #{tpu_custom_call.1} parent=5 // pred_region
        %s281 = ssub.s32 %s22, 1
        %s282 = sand.u32 %s58, 1
        %s283 = scalar_lea.sflag [#allocation3], %s282
        %s284 = sand.u32 %s58, 1
        %s285 = smul.addr %s284, 4
        %s286 = scalar_lea.vmem [#allocation2], %s285
        // Predicated region
        $region37: #{tpu_custom_call.1} parent=35 // pred_check
          %p287 = pneg %p71
        $region38: #{tpu_custom_call.1} parent=35 // pred_check_branch
          %289 = sbr.rel (%p287) target = $region40
        $region39: #{tpu_custom_call.1} parent=35 // pred_region
          %290 = dma.done %s283, 64
        $region40: #{tpu_custom_call.1} parent=35 // pred_fallthru
          _
        %s291 = sand.u32 %s27, 1
        %s292 = scalar_lea.sflag [#allocation6], %s291
        %s293 = sand.u32 %s84, 1
        %s294 = scalar_lea.vmem [#allocation5], %s293
        // Predicated region
        $region41: #{tpu_custom_call.1} parent=35 // pred_check
          %p295 = pneg %p97
        $region42: #{tpu_custom_call.1} parent=35 // pred_check_branch
          %297 = sbr.rel (%p295) target = $region44
        $region43: #{tpu_custom_call.1} parent=35 // pred_region
          %298 = dma.done %s292, 16
        $region44: #{tpu_custom_call.1} parent=35 // pred_fallthru
          _
        %s299 = sand.u32 %s27, 1
        %s300 = scalar_lea.sflag [#allocation6], %s299
        %s301 = sand.u32 %s110, 1
        %s302 = scalar_lea.vmem [#allocation7], %s301
        // Predicated region
        $region45: #{tpu_custom_call.1} parent=35 // pred_check
          %p303 = pneg %p123
        $region46: #{tpu_custom_call.1} parent=35 // pred_check_branch
          %305 = sbr.rel (%p303) target = $region48
        $region47: #{tpu_custom_call.1} parent=35 // pred_region
          %306 = dma.done %s300, 16
        $region48: #{tpu_custom_call.1} parent=35 // pred_fallthru
          _
        %s307 = sand.u32 %s136, 1
        %s308 = scalar_lea.sflag [#allocation9], %s307
        %s309 = sand.u32 %s136, 1
        %s310 = smul.addr %s309, 128
        %s311 = scalar_lea.vmem [#allocation8], %s310
        // Predicated region
        $region49: #{tpu_custom_call.1} parent=35 // pred_check
          %p312 = pneg %p149
        $region50: #{tpu_custom_call.1} parent=35 // pred_check_branch
          %314 = sbr.rel (%p312) target = $region52
        $region51: #{tpu_custom_call.1} parent=35 // pred_region
          %315 = dma.done %s308, 2048
        $region52: #{tpu_custom_call.1} parent=35 // pred_fallthru
          _
        %s316 = sand.u32 %s58, 1
        %s317 = scalar_lea.sflag [#allocation3], %s316
        %s318 = sand.u32 %s58, 1
        %s319 = smul.addr %s318, 4
        %s320 = scalar_lea.vmem [#allocation2], %s319
        %p321 = pneg %p71
        %p322 = pneg %p68
        %s323 = sand.u32 %s27, 1
        %s324 = scalar_lea.sflag [#allocation6], %s323
        %s325 = sand.u32 %s84, 1
        %s326 = scalar_lea.vmem [#allocation5], %s325
        %p327 = pneg %p97
        %p328 = pneg %p94
        %s329 = sand.u32 %s27, 1
        %s330 = scalar_lea.sflag [#allocation6], %s329
        %s331 = sand.u32 %s110, 1
        %s332 = scalar_lea.vmem [#allocation7], %s331
        %p333 = pneg %p123
        %p334 = pneg %p120
        %s335 = sand.u32 %s136, 1
        %s336 = scalar_lea.sflag [#allocation9], %s335
        %s337 = sand.u32 %s136, 1
        %s338 = smul.addr %s337, 128
        %s339 = scalar_lea.vmem [#allocation8], %s338
        %p340 = pneg %p149
        %p341 = pneg %p146
        %p342 = pneg %p177
        %p343 = pneg %p174
        %s344 = sand.u32 %s164, 1
        %s345 = scalar_lea.sflag [#allocation4], %s344
        %s346 = sand.u32 %s164, 1
        %s347 = smul.addr %s346, 8
        %s348 = scalar_lea.vmem [#allocation10], %s347
        %s349 = sadd.s32 %s33, %s34
        %s350 = smul.u32 2, %s349
        %p351 = scmp.eq.s32.totalorder %s34, 0
        // Predicated region
        $region53: #{tpu_custom_call.1} parent=35 // pred_check
          %p352 = pneg %p351
        $region54: #{tpu_custom_call.1} parent=35 // pred_check_branch
          %354 = sbr.rel (%p352) target = $region56
        $region55: #{tpu_custom_call.1} parent=35 // pred_region
          %355 = vst [vmem:[%s348] sm:$0xff] 0.0
        $region56: #{tpu_custom_call.1} parent=35 // pred_fallthru
          _
        %v356 = vld [vmem:[%s286] sm:$0x3]
        %v357 = vld [vmem:[%s286 + $0x2] sm:$0x3]
        %v358 = vunpack.c.0.s8 %v356
        %v359 = vunpack.c.0.s8 %v357
        %v360 = vcvt.s32.f32 %v358
        %v361 = vcvt.s32.f32 %v359
        %v362 = vld [vmem:[%s311] sm:$0xff]
        %v363 = vld [vmem:[%s311 + $0x8] sm:$0xff]
        %v364 = vld [vmem:[%s311 + $0x10] sm:$0xff]
        %v365 = vld [vmem:[%s311 + $0x18] sm:$0xff]
        %v366 = vld [vmem:[%s311 + $0x20] sm:$0xff]
        %v367 = vld [vmem:[%s311 + $0x28] sm:$0xff]
        %v368 = vld [vmem:[%s311 + $0x30] sm:$0xff]
        %v369 = vld [vmem:[%s311 + $0x38] sm:$0xff]
        %v370 = vld [vmem:[%s311 + $0x40] sm:$0xff]
        %v371 = vld [vmem:[%s311 + $0x48] sm:$0xff]
        %v372 = vld [vmem:[%s311 + $0x50] sm:$0xff]
        %v373 = vld [vmem:[%s311 + $0x58] sm:$0xff]
        %v374 = vld [vmem:[%s311 + $0x60] sm:$0xff]
        %v375 = vld [vmem:[%s311 + $0x68] sm:$0xff]
        %v376 = vld [vmem:[%s311 + $0x70] sm:$0xff]
        %v377 = vld [vmem:[%s311 + $0x78] sm:$0xff]
        %v378 = vld [vmem:[%s294] sm:$0x1]
        %v379 = vld [vmem:[%s302] sm:$0x1]
        %380 = vmatprep.subr.mxu0 0.0
        %381 = vmatpush1.msra.mxu0 %v362
        %382 = vmatprep.subr.mxu0 0.0
        %383 = vmatpush1.msra.mxu0 %v363
        %384 = vmatprep.subr.mxu0 0.0
        %385 = vmatpush1.msra.mxu0 %v364
        %386 = vmatprep.subr.mxu0 0.0
        %387 = vmatpush1.msra.mxu0 %v365
        %388 = vmatprep.subr.mxu0 0.0
        %389 = vmatpush1.msra.mxu0 %v366
        %390 = vmatprep.subr.mxu0 0.0
        %391 = vmatpush1.msra.mxu0 %v367
        %392 = vmatprep.subr.mxu0 0.0
        %393 = vmatpush1.msra.mxu0 %v368
        %394 = vmatprep.subr.mxu0 0.0
        %395 = vmatpush1.msra.mxu0 %v369
        %396 = vmatprep.subr.mxu0 0.0
        %397 = vmatpush1.msra.mxu0 %v370
        %398 = vmatprep.subr.mxu0 0.0
        %399 = vmatpush1.msra.mxu0 %v371
        %400 = vmatprep.subr.mxu0 0.0
        %401 = vmatpush1.msra.mxu0 %v372
        %402 = vmatprep.subr.mxu0 0.0
        %403 = vmatpush1.msra.mxu0 %v373
        %404 = vmatprep.subr.mxu0 0.0
        %405 = vmatpush1.msra.mxu0 %v374
        %406 = vmatprep.subr.mxu0 0.0
        %407 = vmatpush1.msra.mxu0 %v375
        %408 = vmatprep.subr.mxu0 0.0
        %409 = vmatpush1.msra.mxu0 %v376
        %410 = vmatprep.subr.mxu0 0.0
        %411 = vmatpush1.msra.mxu0 %v377
        %412 = vmatprep.subr.mxu0 0.0
        %413 = vmatpush1.msra.mxu0 0.0
        %414 = vmatprep.subr.mxu0 0.0
        %415 = vmatpush1.msra.mxu0 0.0
        %416 = vmatprep.subr.mxu0 0.0
        %417 = vmatpush1.msra.mxu0 0.0
        %418 = vmatprep.subr.mxu0 0.0
        %419 = vmatpush1.msra.mxu0 0.0
        %420 = vmatprep.subr.mxu0 0.0
        %421 = vmatpush1.msra.mxu0 0.0
        %422 = vmatprep.subr.mxu0 0.0
        %423 = vmatpush1.msra.mxu0 0.0
        %424 = vmatprep.subr.mxu0 0.0
        %425 = vmatpush1.msra.mxu0 0.0
        %426 = vmatprep.subr.mxu0 0.0
        %427 = vmatpush1.msra.mxu0 0.0
        %428 = vmatprep.subr.mxu0 0.0
        %429 = vmatpush1.msra.mxu0 0.0
        %430 = vmatprep.subr.mxu0 0.0
        %431 = vmatpush1.msra.mxu0 0.0
        %432 = vmatprep.subr.mxu0 0.0
        %433 = vmatpush1.msra.mxu0 0.0
        %434 = vmatprep.subr.mxu0 0.0
        %435 = vmatpush1.msra.mxu0 0.0
        %436 = vmatprep.subr.mxu0 0.0
        %437 = vmatpush1.msra.mxu0 0.0
        %438 = vmatprep.subr.mxu0 0.0
        %439 = vmatpush1.msra.mxu0 0.0
        %440 = vmatprep.subr.mxu0 0.0
        %441 = vmatpush1.msra.mxu0 0.0
        %442 = vmatprep.subr.mxu0 0.0
        %443 = vmatpush1.msra.mxu0 0.0
        %444 = vmatprep.mubr.f32.mxu0 0.0
        %445 = vmatmul.mubr.f32.gmra.mrb[0].mxu0 %v360
        %v446 = vpop.f32.mrb[0].mxu0
        %v447 = vadd.f32 0.0, %v446
        %v448 = vpop.f32.mrb[0].mxu0
        %449 = vmatprep.mubr.f32.mxu0 0.0
        %450 = vmatmul.mubr.f32.gmra.mrb[0].mxu0 %v361
        %v451 = vpop.f32.mrb[0].mxu0
        %v452 = vadd.f32 0.0, %v451
        %v453 = vpop.f32.mrb[0].mxu0
        %454 = vdwg.mxu0
        %v456 = vlaneseq
        %v457 = vshrl.u32 %v456, 7
        %v458 = vsub.s32 0, %v457
        %v459 = vrot.slane %v378, %v458
        %v461 = vadd.f32 %v459, %v447
        %v462 = vadd.f32 %v459, %v452
        %v464 = vlaneseq
        %v465 = vshrl.u32 %v464, 7
        %v466 = vsub.s32 0, %v465
        %v467 = vrot.slane %v379, %v466
        %v469 = vmul.f32 %v360, %v467
        %v470 = vmul.f32 %v361, %v467
        %v471 = vsub.f32 %v461, %v469
        %v472 = vsub.f32 %v462, %v470
        %v473 = vmul.f32 %v360, %v471
        %v474 = vmul.f32 %v361, %v472
        %v475 = vand.u32 2147483647, %v473
        %v476 = vand.u32 2147483647, %v474
        %v477 = vsub.f32 0.0, %v475
        %v478 = vsub.f32 0.0, %v476
        %v479 = vmul.f32 %v477, 1.442695
        %v480 = vpow.pop %v479
        %v481 = vmul.f32 %v478, 1.442695
        %v482 = vpow.pop %v481
        %v483 = vadd.f32 %v480, 1.0
        %v484 = vlog2.pop %v483
        %v485 = vmul.f32 %v484, 0.6931472
        %v486 = vmul.f32 -0.5, %v480
        %v487 = vadd.f32 %v486, 1.0
        %v488 = vmul.f32 %v487, %v480
        %v489 = vand.u32 2147483647, %v480
        %vm490 = vcmp.lt.f32.partialorder %v489, 0.0004427343
        %v491 = vsel %vm490, %v488, %v485
        %v492 = vadd.f32 %v482, 1.0
        %v493 = vlog2.pop %v492
        %v494 = vmul.f32 %v493, 0.6931472
        %v495 = vmul.f32 -0.5, %v482
        %v496 = vadd.f32 %v495, 1.0
        %v497 = vmul.f32 %v496, %v482
        %v498 = vand.u32 2147483647, %v482
        %vm499 = vcmp.lt.f32.partialorder %v498, 0.0004427343
        %v500 = vsel %vm499, %v497, %v494
        %v501 = vmin.f32 %v473, 0.0
        %v502 = vmin.f32 %v474, 0.0
        %v503 = vsub.f32 %v501, %v491
        %v504 = vsub.f32 %v502, %v500
        %v505 = vlaneseq
        %v506 = vand.u32 %v505, 127
        %vm507 = vcmp.lt.s32.totalorder %v506, 32
        %v508 = vsel %vm507, %v503, 0.0
        %v509 = vsel %vm507, %v504, 0.0
        %v510 = vld [vmem:[%s348] sm:$0xff]
        %v511 = vadd.f32 %v508, %v509
        %v512 = vadd.f32 %v510, %v511
        %513 = vst [vmem:[%s348] sm:$0xff] %v512
        %s514 = sand.u32 %s164, 1
        %s515 = scalar_lea.sflag [#allocation4], %s514
        %s516 = sand.u32 %s164, 1
        %s517 = smul.addr %s516, 8
        %s518 = scalar_lea.vmem [#allocation10], %s517
        // Predicated region
        $region57: #{tpu_custom_call.1} parent=35 // pred_check
          %p519 = pneg %p174
        $region58: #{tpu_custom_call.1} parent=35 // pred_check_branch
          %521 = sbr.rel (%p519) target = $region60
        $region59: #{tpu_custom_call.1} parent=35 // pred_region
          %s523 = ssub.s32 128, 128
          %524 = vsyncadd %s515, %s523
          %s525 = smul.addr %s33, 2
          %s526 = sadd.s32 %s32, %s525
          %s527 = smul.addr %s526, 128
          %s528 = scalar_lea.hbm %s4, %s527
          %s530 = sshll.u32 %s518, 4
          %s531 = int_to_ptr.vmem [resolvable:$true] %s530
          %533 = dma.vmem_to_hbm [thread:$0]  %s531, 128, %s528, %s515
        $region60: #{tpu_custom_call.1} parent=35 // pred_fallthru
          _
      $region36: #{tpu_custom_call.1} parent=5 // pred_fallthru
        _
      %p534 = scmp.le.s32.totalorder 2, %s22
      // Predicated region
      $region61: #{tpu_custom_call.1} parent=5 // pred_check
        %p535 = pneg %p534
      $region62: #{tpu_custom_call.1} parent=5 // pred_check_branch
        %537 = sbr.rel (%p535) target = $region64
      $region63: #{tpu_custom_call.1} parent=5 // pred_region
        %s538 = ssub.s32 %s22, 2
        // Predicated region
        $region65: #{tpu_custom_call.1} parent=63 // pred_check
          %p539 = pneg %p180
        $region66: #{tpu_custom_call.1} parent=63 // pred_check_branch
          %541 = sbr.rel (%p539) target = $region68
        $region67: #{tpu_custom_call.1} parent=63 // pred_region
          %s542 = sand.u32 %s165, 1
          %s543 = scalar_lea.sflag [#allocation4], %s542
          %s544 = sand.u32 %s165, 1
          %s545 = smul.addr %s544, 8
          %s546 = scalar_lea.vmem [#allocation10], %s545
          %547 = dma.done %s543, 128
        $region68: #{tpu_custom_call.1} parent=63 // pred_fallthru
          _
      $region64: #{tpu_custom_call.1} parent=5 // pred_fallthru
        _
    $region6: #{tpu_custom_call.1} parent=1 // loop_footer
      %s26 = sadd.s32 1, %s22
    $region7: #{tpu_custom_call.1} parent=1 // loop_footer_branch
      %21 = sbr.rel target = $region3
    $region8: #{tpu_custom_call.1} parent=1 // loop_exit
      _
    %548 = vsyncpa [#allocation3], 1
    %s549 = scalar_lea.sflag [#allocation3], 1
    %550 = vsyncpa %s549, 1
    %551 = vsyncpa [#allocation6], 1
    %s552 = scalar_lea.sflag [#allocation6], 1
    %553 = vsyncpa %s552, 1
    %554 = vsyncpa [#allocation9], 1
    %s555 = scalar_lea.sflag [#allocation9], 1
    %556 = vsyncpa %s555, 1
    %557 = vsyncpa [#allocation4], 1
    %s558 = scalar_lea.sflag [#allocation4], 1
    %559 = vsyncpa %s558, 1

</llo_original>
